<compile_context>
chip_gen: v7x
topology: tpu7x:2x2x1
jax: 0.10.0
libtpu: 0.0.40
codegen_flags: <defaults>
</compile_context>

<pallas_src>
import functools

import jax
import jax.numpy as jnp
from jax import lax
from jax.experimental import pallas as pl
from jax.experimental.pallas import tpu as pltpu


# Tiny-slice threshold below which a plain XLA slice beats a pallas_call launch.
_XLA_FALLBACK_BYTES = 1 << 20  # 1 MiB


def _tensorcores_per_chip() -> int:
    """Best-effort TensorCore-per-chip count; safe fallback to 1 (v5e/v6e)."""
    try:
        info = pltpu.get_tpu_info()
    except Exception:
        return 1
    for attr in ("num_cores", "core_count", "tensorcore_count", "num_tensorcores"):
        n = getattr(info, attr, None)
        if isinstance(n, int) and n >= 1:
            return n
    return 1


def _make_same_hour_kernel(batches_per_chunk: int, slab_elems: int):
    """Kernel: one strided 2-D HBM->HBM DMA covering this chunk's batch rows."""

    def kernel(x_ref, o_ref, sem):
        base = pl.multiple_of(
            pl.program_id(0) * batches_per_chunk, batches_per_chunk
        )
        # Source: (bpc, slab) prefix view of the (B, T*N*F) input (rows strided
        # by the full row length). Destination: the matching contiguous rows of
        # the (B, slab) output. Single descriptor; hardware handles the stride.
        cp = pltpu.make_async_copy(
            x_ref.at[pl.ds(base, batches_per_chunk), pl.ds(0, slab_elems)],
            o_ref.at[pl.ds(base, batches_per_chunk)],
            sem,
        )
        cp.start()
        cp.wait()

    return kernel


@functools.partial(jax.jit, static_argnames=("horizon", "force_pallas"))
def same_hour_forward(x: jax.Array, horizon: int, force_pallas: bool = False) -> jax.Array:
    """Pallas implementation of SameHour.forward: x[:, :horizon, :, :]."""
    B, T, N, F = x.shape
    assert 1 <= horizon <= T, "horizon must be in [1, window]"

    # Fast path: full window -> identity, zero HBM traffic.
    if horizon == T:
        return x

    slab = horizon * N * F   # contiguous elements wanted per batch row
    row = T * N * F          # full (flattened) row length per batch

    # Fast path: tiny slice -> let XLA fuse it (pallas_call launch would dominate).
    out_bytes = B * slab * jnp.dtype(x.dtype).itemsize
    if not force_pallas and out_bytes < _XLA_FALLBACK_BYTES:
        return lax.slice_in_dim(x, 0, horizon, axis=1)

    # Metadata-only reshape (row-major): the per-batch slab becomes a contiguous
    # prefix of each flattened row.
    x2 = x.reshape(B, row)

    # One grid step on single-TC chips; two CORE_PARALLEL chunks on multi-TC
    # chips (v7x) so both TensorCores drive HBM concurrently.
    cores = _tensorcores_per_chip()
    num_chunks = 2 if (cores >= 2 and B >= 2 and B % 2 == 0) else 1
    bpc = B // num_chunks
    dim_sems = (pltpu.CORE_PARALLEL,) if num_chunks > 1 else ("arbitrary",)

    out2 = pl.pallas_call(
        _make_same_hour_kernel(bpc, slab),
        out_shape=jax.ShapeDtypeStruct((B, slab), x.dtype),
        grid_spec=pltpu.PrefetchScalarGridSpec(
            num_scalar_prefetch=0,
            grid=(num_chunks,),
            in_specs=[pl.BlockSpec(memory_space=pl.ANY)],   # raw HBM ref
            out_specs=pl.BlockSpec(memory_space=pl.ANY),    # raw HBM ref
            scratch_shapes=[pltpu.SemaphoreType.DMA(())],
        ),
        compiler_params=pltpu.CompilerParams(
            dimension_semantics=dim_sems,
        ),
    )(x2)

    return out2.reshape(B, horizon, N, F)


if __name__ == "__main__":
    # SameHour(input_size, window, horizon, n_nodes) — no learnable parameters.
    input_size = 4
    window = 8
    horizon = 4
    n_nodes = 16
    batch = 2

    key = jax.random.PRNGKey(0)
    x = jax.random.normal(key, (batch, window, n_nodes, input_size), dtype=jnp.float32)

    ref = x[:, :horizon, :, :]

    # Exercise the Pallas DMA kernel explicitly (at this tiny size the default
    # dispatch would take the XLA fast path).
    out = jax.block_until_ready(same_hour_forward(x, horizon, force_pallas=True))
    assert out.shape == (batch, horizon, n_nodes, input_size)
    assert jnp.array_equal(out, ref), "Pallas output does not match reference slice"

    # Default dispatch (fast paths enabled) must agree.
    out_fast = jax.block_until_ready(same_hour_forward(x, horizon))
    assert jnp.array_equal(out_fast, ref), "fast-path output does not match reference"

    # horizon == window identity fast path.
    out_full = jax.block_until_ready(same_hour_forward(x, window))
    assert jnp.array_equal(out_full, x), "identity fast path mismatch"

    print("KERNEL_OK")
</pallas_src>

<mosaic_0001>
module attributes {stable_mosaic.version = 11 : i64} {
  func.func @kernel(%arg0: i32, %arg1: memref<2x512xf32, #tpu.memory_space<any>>, %arg2: memref<2x256xf32, #tpu.memory_space<any>>, %arg3: memref<!tpu.dma_semaphore, #tpu.memory_space<semaphore_mem>>) attributes {dimension_semantics = [#tpu.dimension_semantics<arbitrary>], iteration_bounds = array<i64: 1>, scalar_prefetch = 0 : i64, scratch_operands = 1 : i64, tpu.core_type = #tpu.core_type<tc>, window_params = [{}, {}]} {
    %c2_i32 = arith.constant 2 : i32
    %0 = arith.muli %arg0, %c2_i32 : i32
    %1 = tpu.assume_multiple %0, 2 : i32
    %c0_i32 = arith.constant 0 : i32
    %2 = tpu.memref_slice %arg1[%1, %c0_i32] : memref<2x512xf32, #tpu.memory_space<any>> -> memref<2x256xf32, #tpu.memory_space<any>>
    %c0_i32_0 = arith.constant 0 : i32
    %3 = tpu.memref_slice %arg2[%1, %c0_i32_0] : memref<2x256xf32, #tpu.memory_space<any>> -> memref<2x256xf32, #tpu.memory_space<any>>
    tpu.enqueue_dma source(%2 : memref<2x256xf32, #tpu.memory_space<any>>) target(%3 : memref<2x256xf32, #tpu.memory_space<any>>) target_semaphore(%arg3 : memref<!tpu.dma_semaphore, #tpu.memory_space<semaphore_mem>>)
    %c0_i32_1 = arith.constant 0 : i32
    %4 = tpu.memref_slice %arg1[%1, %c0_i32_1] : memref<2x512xf32, #tpu.memory_space<any>> -> memref<2x256xf32, #tpu.memory_space<any>>
    %c0_i32_2 = arith.constant 0 : i32
    %5 = tpu.memref_slice %arg2[%1, %c0_i32_2] : memref<2x256xf32, #tpu.memory_space<any>> -> memref<2x256xf32, #tpu.memory_space<any>>
    tpu.wait_dma2 semaphore(%arg3 : memref<!tpu.dma_semaphore, #tpu.memory_space<semaphore_mem>>) src(%4 : memref<2x256xf32, #tpu.memory_space<any>>) dst(%5 : memref<2x256xf32, #tpu.memory_space<any>>)
    return
  }
}

</mosaic_0001>

<llo_original>
// kernel: same_hour_forward.1
$region0: #{same_hour_forward.1}
  #allocation0 [shape = 'u32[]', space=smem, size = 0x4, offset = 0x4, fixed_abs, tag = 'smem constant byte address 0x4 - core index']
  #allocation1 [shape = 'u32[144,128]{1,0:T(1,128)}', space=vmem, size = 0x12000, scoped, tag = 'internal scratch']
  #allocation2 [shape = 's32[1]{0}', space=sflag, size = 0x4, scoped, tag = 'scratch operand']
  #allocation3 [shape = 's32[]', space=sflag, size = 0x4, offset = 0, fixed_abs, tag = 'sflag constant byte address 0x0 - dummy sync flag']
  %s0 = inlined_call_operand.vmem [shape: f32[2,512], index: 0, kind: input, shape index: {}]
  %s1 = inlined_call_operand.vmem [shape: f32[2,256], index: 1, kind: output, shape index: {}]
  %s2 = sld [smem:[#allocation0]]
  $region32: #{same_hour_forward.1} parent=0
    _
  %s4 = ssub.s32 1, %s2
  %s5 = scalar_select 0, %s4, %s2
  %s6 = smul.u32 0, 2
  %s7 = sshra.s32 %s6, 1
  %s8 = sand.u32 %s6, 1
  %s9 = smul.u32 %s7, 4
  %s10 = smul.addr %s9, 2
  %s11 = scalar_lea.vmem %s0, %s10
  %s12 = smul.u32 %s7, 2
  %s13 = smul.addr %s12, 2
  %s14 = scalar_lea.vmem %s1, %s13
  %p16 = scmp.lt.u32.totalorder 4, 8
  %p17 = pneg %p16
  // Predicated region
  $region2: #{same_hour_forward.1} parent=0 // pred_check
    _
  $region3: #{same_hour_forward.1} parent=0 // pred_check_branch
    %19 = sbr.rel (%p16) target = $region5
  $region4: #{same_hour_forward.1} parent=0 // pred_region
    %s34 = sand.u32 4, 7
    %p35 = scmp.eq.s32.totalorder %s34, 0
    %p36 = pneg %p35
    // Predicated region
    $region17: #{same_hour_forward.1} parent=4 // pred_check
      _
    $region18: #{same_hour_forward.1} parent=4 // pred_check_branch
      %38 = sbr.rel (%p35) target = $region20
    $region19: #{same_hour_forward.1} parent=4 // pred_region
      %s39 = sand.u32 4, 7
      %s40 = ssub.s32 4, %s39
      %s41 = scalar_lea.vmem %s11, %s40
      %s42 = ssub.s32 4, %s39
      %s43 = scalar_lea.vmem %s14, %s42
      %s44 = sshllo.u32 0, %s39
      loop: start=0, step=1, limit=1
      $region21: #{same_hour_forward.1} parent=19 // loop_pre_header
        _
      $region22: #{same_hour_forward.1} parent=19 // loop_header
        %s46 = sphi 0, %s50
        %p47 = scmp.ge.s32.totalorder %s46, 1
        %s51 = sphi %s41, %s41
        %s52 = sphi %s43, %s43
      $region23: #{same_hour_forward.1} parent=19 // loop_header_branch
        %49 = sbr.rel (%p47) target = $region27
      $region24: #{same_hour_forward.1} parent=19 // loop_body
        %v53 = vld [vmem:[%s51] sm:%s44]
        %54 = vst [vmem:[%s52] sm:%s44] %v53
      $region25: #{same_hour_forward.1} parent=19 // loop_footer
        %s50 = sadd.s32 1, %s46
      $region26: #{same_hour_forward.1} parent=19 // loop_footer_branch
        %45 = sbr.rel target = $region22
      $region27: #{same_hour_forward.1} parent=19 // loop_exit
        _
    $region20: #{same_hour_forward.1} parent=4 // pred_fallthru
      _
  $region5: #{same_hour_forward.1} parent=0 // pred_fallthru
    _
  // Predicated region
  $region6: #{same_hour_forward.1} parent=0 // pred_check
    %p20 = pneg %p16
  $region7: #{same_hour_forward.1} parent=0 // pred_check_branch
    %22 = sbr.rel (%p20) target = $region9
  $region8: #{same_hour_forward.1} parent=0 // pred_region
    %s23 = sshllo.u32 0, 4
    loop: start=0, step=1, limit=1
    $region10: #{same_hour_forward.1} parent=8 // loop_pre_header
      _
    $region11: #{same_hour_forward.1} parent=8 // loop_header
      %s25 = sphi 0, %s29
      %p26 = scmp.ge.s32.totalorder %s25, 1
      %s30 = sphi %s11, %s11
      %s31 = sphi %s14, %s14
    $region12: #{same_hour_forward.1} parent=8 // loop_header_branch
      %28 = sbr.rel (%p26) target = $region16
    $region13: #{same_hour_forward.1} parent=8 // loop_body
      %v32 = vld [vmem:[%s30] sm:%s23]
      %33 = vst [vmem:[%s31] sm:%s23] %v32
    $region14: #{same_hour_forward.1} parent=8 // loop_footer
      %s29 = sadd.s32 1, %s25
    $region15: #{same_hour_forward.1} parent=8 // loop_footer_branch
      %24 = sbr.rel target = $region11
    $region16: #{same_hour_forward.1} parent=8 // loop_exit
      _
  $region9: #{same_hour_forward.1} parent=0 // pred_fallthru
    _
  // Predicated region
  $region28: #{same_hour_forward.1} parent=0 // pred_check
    _
  $region29: #{same_hour_forward.1} parent=0 // pred_check_branch
    %57 = sbr.rel (0) target = $region31
  $region30: #{same_hour_forward.1} parent=0 // pred_region
    %58 = vsyncadd [#allocation2], 64
  $region31: #{same_hour_forward.1} parent=0 // pred_fallthru
    _
  %s59 = smul.u32 2, 1
  %s60 = smul.u32 %s59, 2
  %s61 = sshll.u32 %s60, 4
  %62 = dma.done [#allocation2], %s61
  %63 = vsyncmov [#allocation2]
  %s64 = vpop.sfrf %63
  %p65 = scmp.eq.s32.totalorder %s64, 0
  %p66 = pneg %p65
  %68 = shalt.err (%p66)

</llo_original>
